<compile_context>
chip_gen: v5e
topology: v5e:2x2
jax: 0.10.0
libtpu: 0.0.40
codegen_flags: <defaults>
</compile_context>

<pallas_src>
import jax
import jax.numpy as jnp
from jax.experimental import pallas as pl
from jax.experimental.pallas import tpu as pltpu


def _fused_kernel(x_ref, w_ref, b_ref, o_ref):
    # x_ref: (B, S, D) full slab, w_ref: (D, D) = (out, in), b_ref: (1, D)
    x = x_ref[...]                       # (B, S, D)
    w = w_ref[...]                       # (D_out, D_in)
    b = b_ref[...]                       # (1, D_out)

    v1 = x + w[None, :, :]               # broadcast add over batch
    B, S, D = v1.shape
    v1_2d = v1.reshape(B * S, D)         # fold batch into the MXU M dimension

    # linear: v1 @ W^T + b, expressed without transposing W
    # (contract v1's feature axis with W's `in` axis).
    y = jax.lax.dot_general(
        v1_2d, w,
        dimension_numbers=(((1,), (1,)), ((), ())),
        preferred_element_type=jnp.float32,
    ) + b                                # (B*S, D_out)

    out = v1_2d * jnp.abs(y)             # v1 * |linear(v1)|
    o_ref[...] = out.reshape(B, S, D).astype(o_ref.dtype)


def fused_permute_linear(x, weight, bias):
    """x: (B, D, D) f32, weight: (D, D) f32, bias: (D,) f32 -> (B, D, D) f32."""
    B, S, D = x.shape
    assert S == D and weight.shape == (D, D) and bias.shape == (D,)
    bias2d = bias.reshape(1, D)

    itemsize = jnp.dtype(x.dtype).itemsize
    flops = 2 * B * S * D * D + 4 * B * S * D          # matmul + elementwise
    bytes_accessed = (2 * x.size + weight.size + bias.size) * itemsize

    return pl.pallas_call(
        _fused_kernel,
        out_shape=jax.ShapeDtypeStruct((B, S, D), x.dtype),
        in_specs=[
            pl.BlockSpec(memory_space=pltpu.MemorySpace.VMEM),   # x (whole slab)
            pl.BlockSpec(memory_space=pltpu.MemorySpace.VMEM),   # weight
            pl.BlockSpec(memory_space=pltpu.MemorySpace.VMEM),   # bias
        ],
        out_specs=pl.BlockSpec(memory_space=pltpu.MemorySpace.VMEM),
        cost_estimate=pl.CostEstimate(
            flops=flops, transcendentals=0, bytes_accessed=bytes_accessed),
    )(x, weight, bias2d)


def reference(x, weight, bias):
    v1 = x + weight                                   # (B, D, D) + (D, D)
    y = jnp.einsum("bsi,oi->bso", v1, weight,
                   precision=jax.lax.Precision.HIGHEST) + bias
    return v1 * jnp.abs(y)


if __name__ == "__main__":
    # Small square config implied by the forward's broadcasting; D = 128 keeps
    # the lane dimension dense (full vreg width) per the perf review.
    B, D = 2, 128

    key = jax.random.PRNGKey(0)
    kx, kw, kb = jax.random.split(key, 3)

    x1 = jax.random.normal(kx, (B, D, D), dtype=jnp.float32)
    # deterministic nn.Linear-style init: U(-1/sqrt(in), 1/sqrt(in))
    bound = 1.0 / (D ** 0.5)
    weight = jax.random.uniform(kw, (D, D), jnp.float32, -bound, bound)
    bias = jax.random.uniform(kb, (D,), jnp.float32, -bound, bound)

    out = jax.block_until_ready(fused_permute_linear(x1, weight, bias))
    ref = reference(x1, weight, bias)

    assert out.shape == (B, D, D)
    assert jnp.allclose(out, ref, atol=2e-5, rtol=2e-5)
    print("KERNEL_OK")
</pallas_src>

<mosaic_0001>
module attributes {stable_mosaic.version = 11 : i64} {
  func.func @_fused_kernel(%arg0: memref<2x128x128xf32, #tpu.memory_space<vmem>>, %arg1: memref<128x128xf32, #tpu.memory_space<vmem>>, %arg2: memref<1x128xf32, #tpu.memory_space<vmem>>, %arg3: memref<2x128x128xf32, #tpu.memory_space<vmem>>) attributes {dimension_semantics = [], scalar_prefetch = 0 : i64, scratch_operands = 0 : i64, tpu.core_type = #tpu.core_type<tc>} {
    %c0 = arith.constant 0 : index
    %c0_0 = arith.constant 0 : index
    %c0_1 = arith.constant 0 : index
    %0 = vector.load %arg0[%c0, %c0_0, %c0_1] : memref<2x128x128xf32, #tpu.memory_space<vmem>>, vector<2x128x128xf32>
    %c0_2 = arith.constant 0 : index
    %c0_3 = arith.constant 0 : index
    %1 = vector.load %arg1[%c0_2, %c0_3] : memref<128x128xf32, #tpu.memory_space<vmem>>, vector<128x128xf32>
    %c0_4 = arith.constant 0 : index
    %c0_5 = arith.constant 0 : index
    %2 = vector.load %arg2[%c0_4, %c0_5] : memref<1x128xf32, #tpu.memory_space<vmem>>, vector<1x128xf32>
    %3 = vector.shape_cast %1 : vector<128x128xf32> to vector<1x128x128xf32>
    %4 = vector.broadcast %3 : vector<1x128x128xf32> to vector<2x128x128xf32>
    %5 = arith.addf %0, %4 : vector<2x128x128xf32>
    %6 = vector.shape_cast %5 : vector<2x128x128xf32> to vector<256x128xf32>
    %cst = arith.constant dense<0.000000e+00> : vector<256x128xf32>
    %7 = tpu.matmul %6, %1, %cst {dimension_numbers = #tpu.dot_dimension_numbers<[1], [1], [0], [0], [0, 0, 1, 0], [], []>} : vector<256x128xf32>, vector<128x128xf32>, vector<256x128xf32> -> vector<256x128xf32>
    %8 = vector.broadcast %2 : vector<1x128xf32> to vector<256x128xf32>
    %9 = arith.addf %7, %8 : vector<256x128xf32>
    %10 = math.absf %9 : vector<256x128xf32>
    %11 = arith.mulf %6, %10 : vector<256x128xf32>
    %12 = vector.shape_cast %11 : vector<256x128xf32> to vector<2x128x128xf32>
    %c0_6 = arith.constant 0 : index
    %c0_7 = arith.constant 0 : index
    %c0_8 = arith.constant 0 : index
    %13 = vector.load %arg3[%c0_6, %c0_7, %c0_8] : memref<2x128x128xf32, #tpu.memory_space<vmem>>, vector<2x128x128xf32>
    tpu.vector_store %arg3[%c0_6, %c0_7, %c0_8], %12 {strides = array<i32>} : memref<2x128x128xf32, #tpu.memory_space<vmem>>, vector<2x128x128xf32>,
    return
  }
}

</mosaic_0001>

<llo_original>
// kernel: tpu_custom_call.1
$region0: #{tpu_custom_call.1}
  #allocation0 [shape = 'u32[]', space=smem, size = 0x4, offset = 0x4, fixed_abs, tag = 'smem constant byte address 0x4 - core index']
  #allocation1 [shape = 'u32[72,128]{1,0:T(1,128)}', space=vmem, size = 0x9000, scoped, tag = 'internal scratch']
  %s0 = inlined_call_operand.hbm [shape: f32[2,128,128], index: 0, kind: input, shape index: {}]
  %s1 = inlined_call_operand.hbm [shape: f32[128,128], index: 1, kind: input, shape index: {}]
  %s2 = inlined_call_operand.vmem [shape: f32[1,128], index: 2, kind: input, shape index: {}]
  %s3 = inlined_call_operand.hbm [shape: f32[2,128,128], index: 3, kind: output, shape index: {}]
  %s4 = sld [smem:[#allocation0]]
  $region30: #{tpu_custom_call.1} parent=0
    _
  %s6 = ssub.s32 1, %s4
  %s7 = scalar_select 0, %s6, %s4
  $region1: #{tpu_custom_call.1} parent=0
    #allocation2 [shape = 'u8[131072]{0}', space=vmem, size = 0x20000, scoped, tag = 'input window, operand 0, single buffered']
    #allocation3 [shape = 's32[1]{0}', space=sflag, size = 0x4, scoped, tag = 'scoped memory for tpu_custom_call.1']
    #allocation4 [shape = 's32[1]{0}', space=sflag, size = 0x4, scoped, tag = 'scoped memory for tpu_custom_call.1']
    #allocation5 [shape = 'u8[65536]{0}', space=vmem, size = 0x10000, scoped, tag = 'input window, operand 1, single buffered']
    #allocation6 [shape = 's32[1]{0}', space=sflag, size = 0x4, scoped, tag = 'scoped memory for tpu_custom_call.1']
    #allocation7 [shape = 'u8[131072]{0}', space=vmem, size = 0x20000, scoped, tag = 'output window, operand 0, single buffered']
    %8 = vsyncpa [#allocation3], 0
    %9 = vsyncpa [#allocation6], 0
    %10 = vsyncpa [#allocation4], 0
    // Predicated region
    $region2: #{tpu_custom_call.1} parent=1 // pred_check
      _
    $region3: #{tpu_custom_call.1} parent=1 // pred_check_branch
      %12 = sbr.rel (0) target = $region5
    $region4: #{tpu_custom_call.1} parent=1 // pred_region
      %14 = vsyncadd [#allocation3], 0
      %s15 = sshll.u32 %s0, 4
      %s16 = int_to_ptr.hbm [resolvable:$true] %s15
      %s17 = sshll.u32 [#allocation2], 4
      %s18 = int_to_ptr.vmem [resolvable:$true] %s17
      %23 = dma.hbm_to_vmem [thread:$0]  %s16, 4096, %s18, [#allocation3], 128, 128, 8
    $region5: #{tpu_custom_call.1} parent=1 // pred_fallthru
      _
    // Predicated region
    $region6: #{tpu_custom_call.1} parent=1 // pred_check
      _
    $region7: #{tpu_custom_call.1} parent=1 // pred_check_branch
      %25 = sbr.rel (0) target = $region9
    $region8: #{tpu_custom_call.1} parent=1 // pred_region
      %27 = vsyncadd [#allocation6], 0
      %s28 = sshll.u32 %s1, 4
      %s29 = int_to_ptr.hbm [resolvable:$true] %s28
      %s30 = sshll.u32 [#allocation5], 4
      %s31 = int_to_ptr.vmem [resolvable:$true] %s30
      %36 = dma.hbm_to_vmem [thread:$0]  %s29, 2048, %s31, [#allocation6], 128, 128, 8
    $region9: #{tpu_custom_call.1} parent=1 // pred_fallthru
      _
    // Predicated region
    $region10: #{tpu_custom_call.1} parent=1 // pred_check
      _
    $region11: #{tpu_custom_call.1} parent=1 // pred_check_branch
      %38 = sbr.rel (0) target = $region13
    $region12: #{tpu_custom_call.1} parent=1 // pred_region
      _
    $region13: #{tpu_custom_call.1} parent=1 // pred_fallthru
      _
    // Predicated region
    $region14: #{tpu_custom_call.1} parent=1 // pred_check
      _
    $region15: #{tpu_custom_call.1} parent=1 // pred_check_branch
      %40 = sbr.rel (0) target = $region17
    $region16: #{tpu_custom_call.1} parent=1 // pred_region
      %42 = dma.done [#allocation3], 4096
    $region17: #{tpu_custom_call.1} parent=1 // pred_fallthru
      _
    // Predicated region
    $region18: #{tpu_custom_call.1} parent=1 // pred_check
      _
    $region19: #{tpu_custom_call.1} parent=1 // pred_check_branch
      %44 = sbr.rel (0) target = $region21
    $region20: #{tpu_custom_call.1} parent=1 // pred_region
      %46 = dma.done [#allocation6], 2048
    $region21: #{tpu_custom_call.1} parent=1 // pred_fallthru
      _
    %v47 = vld [vmem:[#allocation2] sm:$0xff]
    %v48 = vld [vmem:[#allocation2 + $0x8] sm:$0xff]
    %v49 = vld [vmem:[#allocation2 + $0x10] sm:$0xff]
    %v50 = vld [vmem:[#allocation2 + $0x18] sm:$0xff]
    %v51 = vld [vmem:[#allocation2 + $0x20] sm:$0xff]
    %v52 = vld [vmem:[#allocation2 + $0x28] sm:$0xff]
    %v53 = vld [vmem:[#allocation2 + $0x30] sm:$0xff]
    %v54 = vld [vmem:[#allocation2 + $0x38] sm:$0xff]
    %v55 = vld [vmem:[#allocation2 + $0x40] sm:$0xff]
    %v56 = vld [vmem:[#allocation2 + $0x48] sm:$0xff]
    %v57 = vld [vmem:[#allocation2 + $0x50] sm:$0xff]
    %v58 = vld [vmem:[#allocation2 + $0x58] sm:$0xff]
    %v59 = vld [vmem:[#allocation2 + $0x60] sm:$0xff]
    %v60 = vld [vmem:[#allocation2 + $0x68] sm:$0xff]
    %v61 = vld [vmem:[#allocation2 + $0x70] sm:$0xff]
    %v62 = vld [vmem:[#allocation2 + $0x78] sm:$0xff]
    %v63 = vld [vmem:[#allocation2 + $0x80] sm:$0xff]
    %v64 = vld [vmem:[#allocation2 + $0x88] sm:$0xff]
    %v65 = vld [vmem:[#allocation2 + $0x90] sm:$0xff]
    %v66 = vld [vmem:[#allocation2 + $0x98] sm:$0xff]
    %v67 = vld [vmem:[#allocation2 + $0xa0] sm:$0xff]
    %v68 = vld [vmem:[#allocation2 + $0xa8] sm:$0xff]
    %v69 = vld [vmem:[#allocation2 + $0xb0] sm:$0xff]
    %v70 = vld [vmem:[#allocation2 + $0xb8] sm:$0xff]
    %v71 = vld [vmem:[#allocation2 + $0xc0] sm:$0xff]
    %v72 = vld [vmem:[#allocation2 + $0xc8] sm:$0xff]
    %v73 = vld [vmem:[#allocation2 + $0xd0] sm:$0xff]
    %v74 = vld [vmem:[#allocation2 + $0xd8] sm:$0xff]
    %v75 = vld [vmem:[#allocation2 + $0xe0] sm:$0xff]
    %v76 = vld [vmem:[#allocation2 + $0xe8] sm:$0xff]
    %v77 = vld [vmem:[#allocation2 + $0xf0] sm:$0xff]
    %v78 = vld [vmem:[#allocation2 + $0xf8] sm:$0xff]
    %v79 = vld [vmem:[#allocation5] sm:$0xff]
    %v80 = vld [vmem:[#allocation5 + $0x8] sm:$0xff]
    %v81 = vld [vmem:[#allocation5 + $0x10] sm:$0xff]
    %v82 = vld [vmem:[#allocation5 + $0x18] sm:$0xff]
    %v83 = vld [vmem:[#allocation5 + $0x20] sm:$0xff]
    %v84 = vld [vmem:[#allocation5 + $0x28] sm:$0xff]
    %v85 = vld [vmem:[#allocation5 + $0x30] sm:$0xff]
    %v86 = vld [vmem:[#allocation5 + $0x38] sm:$0xff]
    %v87 = vld [vmem:[#allocation5 + $0x40] sm:$0xff]
    %v88 = vld [vmem:[#allocation5 + $0x48] sm:$0xff]
    %v89 = vld [vmem:[#allocation5 + $0x50] sm:$0xff]
    %v90 = vld [vmem:[#allocation5 + $0x58] sm:$0xff]
    %v91 = vld [vmem:[#allocation5 + $0x60] sm:$0xff]
    %v92 = vld [vmem:[#allocation5 + $0x68] sm:$0xff]
    %v93 = vld [vmem:[#allocation5 + $0x70] sm:$0xff]
    %v94 = vld [vmem:[#allocation5 + $0x78] sm:$0xff]
    %v95 = vld [vmem:[%s2] sm:$0x1]
    %v96 = vadd.f32 %v47, %v79
    %v97 = vadd.f32 %v48, %v80
    %v98 = vadd.f32 %v49, %v81
    %v99 = vadd.f32 %v50, %v82
    %v100 = vadd.f32 %v51, %v83
    %v101 = vadd.f32 %v52, %v84
    %v102 = vadd.f32 %v53, %v85
    %v103 = vadd.f32 %v54, %v86
    %v104 = vadd.f32 %v55, %v87
    %v105 = vadd.f32 %v56, %v88
    %v106 = vadd.f32 %v57, %v89
    %v107 = vadd.f32 %v58, %v90
    %v108 = vadd.f32 %v59, %v91
    %v109 = vadd.f32 %v60, %v92
    %v110 = vadd.f32 %v61, %v93
    %v111 = vadd.f32 %v62, %v94
    %v112 = vadd.f32 %v63, %v79
    %v113 = vadd.f32 %v64, %v80
    %v114 = vadd.f32 %v65, %v81
    %v115 = vadd.f32 %v66, %v82
    %v116 = vadd.f32 %v67, %v83
    %v117 = vadd.f32 %v68, %v84
    %v118 = vadd.f32 %v69, %v85
    %v119 = vadd.f32 %v70, %v86
    %v120 = vadd.f32 %v71, %v87
    %v121 = vadd.f32 %v72, %v88
    %v122 = vadd.f32 %v73, %v89
    %v123 = vadd.f32 %v74, %v90
    %v124 = vadd.f32 %v75, %v91
    %v125 = vadd.f32 %v76, %v92
    %v126 = vadd.f32 %v77, %v93
    %v127 = vadd.f32 %v78, %v94
    %v129 = vperm.slane %v95, 0
    %131 = vmatpush.xpose.msra.mxu0 %v94
    %132 = vmatpush.xpose.msra.mxu0 %v93
    %133 = vmatpush.xpose.msra.mxu0 %v92
    %134 = vmatpush.xpose.msra.mxu0 %v91
    %135 = vmatpush.xpose.msra.mxu0 %v90
    %136 = vmatpush.xpose.msra.mxu0 %v89
    %137 = vmatpush.xpose.msra.mxu0 %v88
    %138 = vmatpush.xpose.msra.mxu0 %v87
    %139 = vmatpush.xpose.msra.mxu0 %v86
    %140 = vmatpush.xpose.msra.mxu0 %v85
    %141 = vmatpush.xpose.msra.mxu0 %v84
    %142 = vmatpush.xpose.msra.mxu0 %v83
    %143 = vmatpush.xpose.msra.mxu0 %v82
    %144 = vmatpush.xpose.msra.mxu0 %v81
    %145 = vmatpush.xpose.msra.mxu0 %v80
    %146 = vmatpush.xpose.msra.mxu0 %v79
    %147 = vmatmul.f32.gmra.mxu0 %v96
    %v148 = vpop.f32.mrf.mxu0
    %v149 = vadd.f32 %v129, %v148
    %150 = vmatmul.f32.gmra.mxu0 %v97
    %v151 = vpop.f32.mrf.mxu0
    %v152 = vadd.f32 %v129, %v151
    %153 = vmatmul.f32.gmra.mxu0 %v98
    %v154 = vpop.f32.mrf.mxu0
    %v155 = vadd.f32 %v129, %v154
    %156 = vmatmul.f32.gmra.mxu0 %v99
    %v157 = vpop.f32.mrf.mxu0
    %v158 = vadd.f32 %v129, %v157
    %159 = vmatmul.f32.gmra.mxu0 %v100
    %v160 = vpop.f32.mrf.mxu0
    %v161 = vadd.f32 %v129, %v160
    %162 = vmatmul.f32.gmra.mxu0 %v101
    %v163 = vpop.f32.mrf.mxu0
    %v164 = vadd.f32 %v129, %v163
    %165 = vmatmul.f32.gmra.mxu0 %v102
    %v166 = vpop.f32.mrf.mxu0
    %v167 = vadd.f32 %v129, %v166
    %168 = vmatmul.f32.gmra.mxu0 %v103
    %v169 = vpop.f32.mrf.mxu0
    %v170 = vadd.f32 %v129, %v169
    %171 = vmatmul.f32.gmra.mxu0 %v104
    %v172 = vpop.f32.mrf.mxu0
    %v173 = vadd.f32 %v129, %v172
    %174 = vmatmul.f32.gmra.mxu0 %v105
    %v175 = vpop.f32.mrf.mxu0
    %v176 = vadd.f32 %v129, %v175
    %177 = vmatmul.f32.gmra.mxu0 %v106
    %v178 = vpop.f32.mrf.mxu0
    %v179 = vadd.f32 %v129, %v178
    %180 = vmatmul.f32.gmra.mxu0 %v107
    %v181 = vpop.f32.mrf.mxu0
    %v182 = vadd.f32 %v129, %v181
    %183 = vmatmul.f32.gmra.mxu0 %v108
    %v184 = vpop.f32.mrf.mxu0
    %v185 = vadd.f32 %v129, %v184
    %186 = vmatmul.f32.gmra.mxu0 %v109
    %v187 = vpop.f32.mrf.mxu0
    %v188 = vadd.f32 %v129, %v187
    %189 = vmatmul.f32.gmra.mxu0 %v110
    %v190 = vpop.f32.mrf.mxu0
    %v191 = vadd.f32 %v129, %v190
    %192 = vmatmul.f32.gmra.mxu0 %v111
    %v193 = vpop.f32.mrf.mxu0
    %v194 = vadd.f32 %v129, %v193
    %195 = vmatmul.f32.gmra.mxu0 %v112
    %v196 = vpop.f32.mrf.mxu0
    %v197 = vadd.f32 %v129, %v196
    %198 = vmatmul.f32.gmra.mxu0 %v113
    %v199 = vpop.f32.mrf.mxu0
    %v200 = vadd.f32 %v129, %v199
    %201 = vmatmul.f32.gmra.mxu0 %v114
    %v202 = vpop.f32.mrf.mxu0
    %v203 = vadd.f32 %v129, %v202
    %204 = vmatmul.f32.gmra.mxu0 %v115
    %v205 = vpop.f32.mrf.mxu0
    %v206 = vadd.f32 %v129, %v205
    %207 = vmatmul.f32.gmra.mxu0 %v116
    %v208 = vpop.f32.mrf.mxu0
    %v209 = vadd.f32 %v129, %v208
    %210 = vmatmul.f32.gmra.mxu0 %v117
    %v211 = vpop.f32.mrf.mxu0
    %v212 = vadd.f32 %v129, %v211
    %213 = vmatmul.f32.gmra.mxu0 %v118
    %v214 = vpop.f32.mrf.mxu0
    %v215 = vadd.f32 %v129, %v214
    %216 = vmatmul.f32.gmra.mxu0 %v119
    %v217 = vpop.f32.mrf.mxu0
    %v218 = vadd.f32 %v129, %v217
    %219 = vmatmul.f32.gmra.mxu0 %v120
    %v220 = vpop.f32.mrf.mxu0
    %v221 = vadd.f32 %v129, %v220
    %222 = vmatmul.f32.gmra.mxu0 %v121
    %v223 = vpop.f32.mrf.mxu0
    %v224 = vadd.f32 %v129, %v223
    %225 = vmatmul.f32.gmra.mxu0 %v122
    %v226 = vpop.f32.mrf.mxu0
    %v227 = vadd.f32 %v129, %v226
    %228 = vmatmul.f32.gmra.mxu0 %v123
    %v229 = vpop.f32.mrf.mxu0
    %v230 = vadd.f32 %v129, %v229
    %231 = vmatmul.f32.gmra.mxu0 %v124
    %v232 = vpop.f32.mrf.mxu0
    %v233 = vadd.f32 %v129, %v232
    %234 = vmatmul.f32.gmra.mxu0 %v125
    %v235 = vpop.f32.mrf.mxu0
    %v236 = vadd.f32 %v129, %v235
    %237 = vmatmul.f32.gmra.mxu0 %v126
    %v238 = vpop.f32.mrf.mxu0
    %v239 = vadd.f32 %v129, %v238
    %240 = vmatmul.f32.gmra.mxu0 %v127
    %v241 = vpop.f32.mrf.mxu0
    %v242 = vadd.f32 %v129, %v241
    %243 = vdwg.mxu0
    %v244 = vand.u32 2147483647, %v149
    %v245 = vand.u32 2147483647, %v152
    %v246 = vand.u32 2147483647, %v155
    %v247 = vand.u32 2147483647, %v158
    %v248 = vand.u32 2147483647, %v161
    %v249 = vand.u32 2147483647, %v164
    %v250 = vand.u32 2147483647, %v167
    %v251 = vand.u32 2147483647, %v170
    %v252 = vand.u32 2147483647, %v173
    %v253 = vand.u32 2147483647, %v176
    %v254 = vand.u32 2147483647, %v179
    %v255 = vand.u32 2147483647, %v182
    %v256 = vand.u32 2147483647, %v185
    %v257 = vand.u32 2147483647, %v188
    %v258 = vand.u32 2147483647, %v191
    %v259 = vand.u32 2147483647, %v194
    %v260 = vand.u32 2147483647, %v197
    %v261 = vand.u32 2147483647, %v200
    %v262 = vand.u32 2147483647, %v203
    %v263 = vand.u32 2147483647, %v206
    %v264 = vand.u32 2147483647, %v209
    %v265 = vand.u32 2147483647, %v212
    %v266 = vand.u32 2147483647, %v215
    %v267 = vand.u32 2147483647, %v218
    %v268 = vand.u32 2147483647, %v221
    %v269 = vand.u32 2147483647, %v224
    %v270 = vand.u32 2147483647, %v227
    %v271 = vand.u32 2147483647, %v230
    %v272 = vand.u32 2147483647, %v233
    %v273 = vand.u32 2147483647, %v236
    %v274 = vand.u32 2147483647, %v239
    %v275 = vand.u32 2147483647, %v242
    %v276 = vmul.f32 %v96, %v244
    %v277 = vmul.f32 %v97, %v245
    %v278 = vmul.f32 %v98, %v246
    %v279 = vmul.f32 %v99, %v247
    %v280 = vmul.f32 %v100, %v248
    %v281 = vmul.f32 %v101, %v249
    %v282 = vmul.f32 %v102, %v250
    %v283 = vmul.f32 %v103, %v251
    %v284 = vmul.f32 %v104, %v252
    %v285 = vmul.f32 %v105, %v253
    %v286 = vmul.f32 %v106, %v254
    %v287 = vmul.f32 %v107, %v255
    %v288 = vmul.f32 %v108, %v256
    %v289 = vmul.f32 %v109, %v257
    %v290 = vmul.f32 %v110, %v258
    %v291 = vmul.f32 %v111, %v259
    %v292 = vmul.f32 %v112, %v260
    %v293 = vmul.f32 %v113, %v261
    %v294 = vmul.f32 %v114, %v262
    %v295 = vmul.f32 %v115, %v263
    %v296 = vmul.f32 %v116, %v264
    %v297 = vmul.f32 %v117, %v265
    %v298 = vmul.f32 %v118, %v266
    %v299 = vmul.f32 %v119, %v267
    %v300 = vmul.f32 %v120, %v268
    %v301 = vmul.f32 %v121, %v269
    %v302 = vmul.f32 %v122, %v270
    %v303 = vmul.f32 %v123, %v271
    %v304 = vmul.f32 %v124, %v272
    %v305 = vmul.f32 %v125, %v273
    %v306 = vmul.f32 %v126, %v274
    %v307 = vmul.f32 %v127, %v275
    %308 = vst [vmem:[#allocation7] sm:$0xff] %v276
    %309 = vst [vmem:[#allocation7 + $0x8] sm:$0xff] %v277
    %310 = vst [vmem:[#allocation7 + $0x10] sm:$0xff] %v278
    %311 = vst [vmem:[#allocation7 + $0x18] sm:$0xff] %v279
    %312 = vst [vmem:[#allocation7 + $0x20] sm:$0xff] %v280
    %313 = vst [vmem:[#allocation7 + $0x28] sm:$0xff] %v281
    %314 = vst [vmem:[#allocation7 + $0x30] sm:$0xff] %v282
    %315 = vst [vmem:[#allocation7 + $0x38] sm:$0xff] %v283
    %316 = vst [vmem:[#allocation7 + $0x40] sm:$0xff] %v284
    %317 = vst [vmem:[#allocation7 + $0x48] sm:$0xff] %v285
    %318 = vst [vmem:[#allocation7 + $0x50] sm:$0xff] %v286
    %319 = vst [vmem:[#allocation7 + $0x58] sm:$0xff] %v287
    %320 = vst [vmem:[#allocation7 + $0x60] sm:$0xff] %v288
    %321 = vst [vmem:[#allocation7 + $0x68] sm:$0xff] %v289
    %322 = vst [vmem:[#allocation7 + $0x70] sm:$0xff] %v290
    %323 = vst [vmem:[#allocation7 + $0x78] sm:$0xff] %v291
    %324 = vst [vmem:[#allocation7 + $0x80] sm:$0xff] %v292
    %325 = vst [vmem:[#allocation7 + $0x88] sm:$0xff] %v293
    %326 = vst [vmem:[#allocation7 + $0x90] sm:$0xff] %v294
    %327 = vst [vmem:[#allocation7 + $0x98] sm:$0xff] %v295
    %328 = vst [vmem:[#allocation7 + $0xa0] sm:$0xff] %v296
    %329 = vst [vmem:[#allocation7 + $0xa8] sm:$0xff] %v297
    %330 = vst [vmem:[#allocation7 + $0xb0] sm:$0xff] %v298
    %331 = vst [vmem:[#allocation7 + $0xb8] sm:$0xff] %v299
    %332 = vst [vmem:[#allocation7 + $0xc0] sm:$0xff] %v300
    %333 = vst [vmem:[#allocation7 + $0xc8] sm:$0xff] %v301
    %334 = vst [vmem:[#allocation7 + $0xd0] sm:$0xff] %v302
    %335 = vst [vmem:[#allocation7 + $0xd8] sm:$0xff] %v303
    %336 = vst [vmem:[#allocation7 + $0xe0] sm:$0xff] %v304
    %337 = vst [vmem:[#allocation7 + $0xe8] sm:$0xff] %v305
    %338 = vst [vmem:[#allocation7 + $0xf0] sm:$0xff] %v306
    %339 = vst [vmem:[#allocation7 + $0xf8] sm:$0xff] %v307
    // Predicated region
    $region22: #{tpu_custom_call.1} parent=1 // pred_check
      _
    $region23: #{tpu_custom_call.1} parent=1 // pred_check_branch
      %341 = sbr.rel (0) target = $region25
    $region24: #{tpu_custom_call.1} parent=1 // pred_region
      %343 = vsyncadd [#allocation4], 0
      %s344 = sshll.u32 [#allocation7], 4
      %s345 = int_to_ptr.vmem [resolvable:$true] %s344
      %s346 = sshll.u32 %s3, 4
      %s347 = int_to_ptr.hbm [resolvable:$true] %s346
      %352 = dma.vmem_to_hbm [thread:$0]  %s345, 4096, %s347, [#allocation4], 128, 128, 8
    $region25: #{tpu_custom_call.1} parent=1 // pred_fallthru
      _
    // Predicated region
    $region26: #{tpu_custom_call.1} parent=1 // pred_check
      _
    $region27: #{tpu_custom_call.1} parent=1 // pred_check_branch
      %354 = sbr.rel (0) target = $region29
    $region28: #{tpu_custom_call.1} parent=1 // pred_region
      %356 = dma.done [#allocation4], 4096
    $region29: #{tpu_custom_call.1} parent=1 // pred_fallthru
      _
    %357 = vsyncpa [#allocation3], 1
    %358 = vsyncpa [#allocation6], 1
    %359 = vsyncpa [#allocation4], 1

</llo_original>
